<compile_context>
chip_gen: v5e
topology: v5e:2x2
jax: 0.10.0
libtpu: 0.0.40
codegen_flags: <defaults>
</compile_context>

<pallas_src>
import functools

import jax
import jax.numpy as jnp
from jax import lax
from jax.experimental import pallas as pl
from jax.experimental.pallas import tpu as pltpu

_EPS = 1e-12            # F.normalize default eps
_EPS_SQ = _EPS * _EPS   # rsqrt(max(sumsq, eps^2)) == 1 / max(||v||, eps)


def _round_up(x, m):
    return (x + m - 1) // m * m


# ---------------------------------------------------------------------------
# Kernels
# ---------------------------------------------------------------------------

def _sim_kernel_2d(x_ref, y_ref, ix_ref, iy_ref, o_ref):
    """Whole-D-in-one-shot variant: 2D parallel grid, no reduction axis."""
    s = lax.dot_general(
        x_ref[...], y_ref[...],
        dimension_numbers=(((1,), (1,)), ((), ())),   # contract D on both, no transpose
        preferred_element_type=jnp.float32,
    )
    o_ref[...] = (s * ix_ref[...] * iy_ref[...]).astype(o_ref.dtype)


def _sim_kernel_3d(x_ref, y_ref, ix_ref, iy_ref, o_ref, *acc):
    """K-tiled variant.  If no scratch is passed, accumulate directly in o_ref (f32)."""
    acc_ref = acc[0] if acc else o_ref
    k = pl.program_id(2)

    @pl.when(k == 0)
    def _init():
        acc_ref[...] = jnp.zeros_like(acc_ref)

    acc_ref[...] += lax.dot_general(
        x_ref[...], y_ref[...],
        dimension_numbers=(((1,), (1,)), ((), ())),
        preferred_element_type=jnp.float32,
    )

    @pl.when(k == pl.num_programs(2) - 1)
    def _finalize():
        o_ref[...] = (acc_ref[...] * ix_ref[...] * iy_ref[...]).astype(o_ref.dtype)


# ---------------------------------------------------------------------------
# Tile selection
# ---------------------------------------------------------------------------

def _vmem_capacity_bytes():
    try:
        return int(pltpu.get_tpu_info().vmem_capacity_bytes)
    except Exception:
        return 64 << 20   # conservative (v7x per-TC physical)


def _choose_tiles(M, N, D, in_dtype, out_dtype):
    in_b = jnp.dtype(in_dtype).itemsize
    out_b = jnp.dtype(out_dtype).itemsize
    row_align = {1: 32, 2: 16}.get(in_b, 8)   # sublane granularity per input dtype

    cap = _vmem_capacity_bytes()
    budget = min(cap // 2, 48 << 20)          # tile budget safe on all generations

    def vmem_need(tm, tn, tk):
        ins = 2 * (tm + tn) * tk * in_b                       # double-buffered X/Y tiles
        norms = 2 * (tm + tn + 256) * 4                       # inv_x / inv_y tiles
        outs = 2 * tm * tn * out_b                            # output tile (dbl-buffered)
        acc = tm * tn * 4 if jnp.dtype(out_dtype) != jnp.dtype(jnp.float32) else 0
        return ins + norms + outs + acc

    tm = min(512, _round_up(M, row_align))
    tn = min(512, _round_up(N, 128))
    dp_full = _round_up(D, 128)

    # Prefer the whole reduction in one shot (no k axis at all).
    tk = dp_full
    if vmem_need(tm, tn, tk) > budget:
        tk = min(dp_full, 512)
        while vmem_need(tm, tn, tk) > budget and tk > 128:
            tk = max(128, (tk // 2) // 128 * 128)

    need = vmem_need(tm, tn, tk)
    vmem_limit = int(min(max(need + (16 << 20), 32 << 20), cap * 3 // 4))
    return tm, tn, tk, vmem_limit


# ---------------------------------------------------------------------------
# Wrapper
# ---------------------------------------------------------------------------

@functools.partial(jax.jit,
                   static_argnames=("tm", "tn", "tk", "out_dtype", "vmem_limit"))
def _similarity_impl(x, y, *, tm, tn, tk, out_dtype, vmem_limit):
    M, D = x.shape
    N, _ = y.shape

    # Row-norm reciprocals, computed once (hoisted out of the kernel / k-loop).
    xf = x.astype(jnp.float32)
    yf = y.astype(jnp.float32)
    inv_x = lax.rsqrt(jnp.maximum(jnp.sum(xf * xf, axis=1, keepdims=True), _EPS_SQ))      # (M, 1)
    inv_y = lax.rsqrt(jnp.maximum(jnp.sum(yf * yf, axis=1, keepdims=True), _EPS_SQ)).T    # (1, N)

    mp = _round_up(M, tm)
    np_ = _round_up(N, tn)
    dp = _round_up(D, tk)

    xp = jnp.pad(x, ((0, mp - M), (0, dp - D))) if (mp, dp) != (M, D) else x
    yp = jnp.pad(y, ((0, np_ - N), (0, dp - D))) if (np_, dp) != (N, D) else y
    ixp = jnp.pad(inv_x, ((0, mp - M), (0, 0))) if mp != M else inv_x
    iyp = jnp.pad(inv_y, ((0, 0), (0, np_ - N))) if np_ != N else inv_y

    kt = dp // tk
    cost = pl.CostEstimate(
        flops=2 * M * N * D,
        transcendentals=0,
        bytes_accessed=(M * D * x.dtype.itemsize
                        + N * D * y.dtype.itemsize
                        + M * N * jnp.dtype(out_dtype).itemsize),
    )

    if kt == 1:
        # Collapsed reduction: 2D purely-parallel grid, no scratch, no init/finalize.
        out = pl.pallas_call(
            _sim_kernel_2d,
            out_shape=jax.ShapeDtypeStruct((mp, np_), out_dtype),
            grid=(mp // tm, np_ // tn),
            in_specs=[
                pl.BlockSpec((tm, tk), lambda i, j: (i, 0)),
                pl.BlockSpec((tn, tk), lambda i, j: (j, 0)),
                pl.BlockSpec((tm, 1), lambda i, j: (i, 0)),
                pl.BlockSpec((1, tn), lambda i, j: (0, j)),
            ],
            out_specs=pl.BlockSpec((tm, tn), lambda i, j: (i, j)),
            compiler_params=pltpu.CompilerParams(
                dimension_semantics=("parallel", "parallel"),
                vmem_limit_bytes=vmem_limit,
            ),
            cost_estimate=cost,
        )(xp, yp, ixp, iyp)
    else:
        # K-tiled reduction.  f32 output -> accumulate directly into the resident
        # output tile (no acc scratch); narrower output -> f32 scratch accumulator.
        needs_acc = jnp.dtype(out_dtype) != jnp.dtype(jnp.float32)
        scratch = [pltpu.VMEM((tm, tn), jnp.float32)] if needs_acc else []
        out = pl.pallas_call(
            _sim_kernel_3d,
            out_shape=jax.ShapeDtypeStruct((mp, np_), out_dtype),
            grid=(mp // tm, np_ // tn, kt),
            in_specs=[
                pl.BlockSpec((tm, tk), lambda i, j, k: (i, k)),
                pl.BlockSpec((tn, tk), lambda i, j, k: (j, k)),
                pl.BlockSpec((tm, 1), lambda i, j, k: (i, 0)),
                pl.BlockSpec((1, tn), lambda i, j, k: (0, j)),
            ],
            out_specs=pl.BlockSpec((tm, tn), lambda i, j, k: (i, j)),
            scratch_shapes=scratch,
            compiler_params=pltpu.CompilerParams(
                dimension_semantics=("parallel", "parallel", "arbitrary"),
                vmem_limit_bytes=vmem_limit,
            ),
            cost_estimate=cost,
        )(xp, yp, ixp, iyp)

    if (mp, np_) != (M, N):
        out = out[:M, :N]
    return out


def similarity_mechanism(x, y, *, out_dtype=None):
    """Cosine-similarity matrix between rows of x (M, D) and rows of y (N, D)."""
    x = jnp.asarray(x)
    y = jnp.asarray(y)
    M, D = x.shape
    N, Dy = y.shape
    assert D == Dy, "feature dims must match"

    if out_dtype is None:
        out_dtype = x.dtype if jnp.issubdtype(x.dtype, jnp.floating) else jnp.float32
    out_dtype = jnp.dtype(out_dtype)

    tm, tn, tk, vmem_limit = _choose_tiles(M, N, D, x.dtype, out_dtype)
    return _similarity_impl(x, y, tm=tm, tn=tn, tk=tk,
                            out_dtype=out_dtype, vmem_limit=vmem_limit)


# ---------------------------------------------------------------------------
# Reference + smoke test
# ---------------------------------------------------------------------------

def _reference(x, y):
    x = x.astype(jnp.float32)
    y = y.astype(jnp.float32)
    xn = x / jnp.maximum(jnp.linalg.norm(x, axis=1, keepdims=True), _EPS)
    yn = y / jnp.maximum(jnp.linalg.norm(y, axis=1, keepdims=True), _EPS)
    return xn @ yn.T


if __name__ == "__main__":
    key = jax.random.PRNGKey(0)
    kx, ky = jax.random.split(key)

    # Small shapes consistent with the forward:
    #   X: (M=16, D=32) input vectors, Y: (N=8, D=32) existing vectors.
    M, N, D = 16, 8, 32
    x = jax.random.normal(kx, (M, D), dtype=jnp.float32)
    y = jax.random.normal(ky, (N, D), dtype=jnp.float32)

    out = similarity_mechanism(x, y)
    out = jax.block_until_ready(out)

    ref = _reference(x, y)
    assert out.shape == (M, N)
    assert out.dtype == x.dtype
    assert jnp.allclose(out.astype(jnp.float32), ref, atol=1e-4, rtol=1e-4), \
        "mismatch vs reference"

    print("KERNEL_OK")
</pallas_src>

<mosaic_0001>
module attributes {stable_mosaic.version = 11 : i64} {
  func.func @_sim_kernel_2d(%arg0: i32, %arg1: i32, %arg2: memref<16x128xf32, #tpu.memory_space<vmem>>, %arg3: memref<128x128xf32, #tpu.memory_space<vmem>>, %arg4: memref<16x1xf32, #tpu.memory_space<vmem>>, %arg5: memref<1x128xf32, #tpu.memory_space<vmem>>, %arg6: memref<16x128xf32, #tpu.memory_space<vmem>>) attributes {dimension_semantics = [#tpu.dimension_semantics<parallel>, #tpu.dimension_semantics<parallel>], iteration_bounds = array<i64: 1, 1>, scalar_prefetch = 0 : i64, scratch_operands = 0 : i64, tpu.core_type = #tpu.core_type<tc>, window_params = [{transform_indices = @transform_0, window_bounds = array<i64: 16, 128>}, {transform_indices = @transform_1, window_bounds = array<i64: 128, 128>}, {transform_indices = @transform_2, window_bounds = array<i64: 16, 1>}, {transform_indices = @transform_3, window_bounds = array<i64: 1, 128>}, {transform_indices = @transform_4, window_bounds = array<i64: 16, 128>}]} {
    %c0 = arith.constant 0 : index
    %c0_0 = arith.constant 0 : index
    %0 = vector.load %arg2[%c0, %c0_0] : memref<16x128xf32, #tpu.memory_space<vmem>>, vector<16x128xf32>
    %c0_1 = arith.constant 0 : index
    %c0_2 = arith.constant 0 : index
    %1 = vector.load %arg3[%c0_1, %c0_2] : memref<128x128xf32, #tpu.memory_space<vmem>>, vector<128x128xf32>
    %cst = arith.constant dense<0.000000e+00> : vector<16x128xf32>
    %2 = tpu.matmul %0, %1, %cst {dimension_numbers = #tpu.dot_dimension_numbers<[1], [1], [0], [0], [0, 0, 1, 0], [], []>} : vector<16x128xf32>, vector<128x128xf32>, vector<16x128xf32> -> vector<16x128xf32>
    %c0_3 = arith.constant 0 : index
    %c0_4 = arith.constant 0 : index
    %3 = vector.load %arg4[%c0_3, %c0_4] : memref<16x1xf32, #tpu.memory_space<vmem>>, vector<16x1xf32>
    %4 = vector.broadcast %3 : vector<16x1xf32> to vector<16x128xf32>
    %5 = arith.mulf %2, %4 : vector<16x128xf32>
    %c0_5 = arith.constant 0 : index
    %c0_6 = arith.constant 0 : index
    %6 = vector.load %arg5[%c0_5, %c0_6] : memref<1x128xf32, #tpu.memory_space<vmem>>, vector<1x128xf32>
    %7 = vector.broadcast %6 : vector<1x128xf32> to vector<16x128xf32>
    %8 = arith.mulf %5, %7 : vector<16x128xf32>
    %c0_7 = arith.constant 0 : index
    %c0_8 = arith.constant 0 : index
    %9 = vector.load %arg6[%c0_7, %c0_8] : memref<16x128xf32, #tpu.memory_space<vmem>>, vector<16x128xf32>
    tpu.vector_store %arg6[%c0_7, %c0_8], %8 {strides = array<i32>} : memref<16x128xf32, #tpu.memory_space<vmem>>, vector<16x128xf32>,
    return
  }
  func.func @transform_0(%arg0: i32, %arg1: i32) -> (i32, i32) {
    %c0_i32 = arith.constant 0 : i32
    %c0_i32_0 = arith.constant 0 : i32
    return %arg0, %c0_i32 : i32, i32
  }
  func.func @transform_1(%arg0: i32, %arg1: i32) -> (i32, i32) {
    %c0_i32 = arith.constant 0 : i32
    %c0_i32_0 = arith.constant 0 : i32
    return %arg1, %c0_i32 : i32, i32
  }
  func.func @transform_2(%arg0: i32, %arg1: i32) -> (i32, i32) {
    %c0_i32 = arith.constant 0 : i32
    %c0_i32_0 = arith.constant 0 : i32
    return %arg0, %c0_i32 : i32, i32
  }
  func.func @transform_3(%arg0: i32, %arg1: i32) -> (i32, i32) {
    %c0_i32 = arith.constant 0 : i32
    %c0_i32_0 = arith.constant 0 : i32
    return %c0_i32, %arg1 : i32, i32
  }
  func.func @transform_4(%arg0: i32, %arg1: i32) -> (i32, i32) {
    %c0_i32 = arith.constant 0 : i32
    return %arg0, %arg1 : i32, i32
  }
}

</mosaic_0001>

<llo_original>
// kernel: _similarity_impl.1
$region0: #{_similarity_impl.1}
  #allocation0 [shape = 'u32[]', space=smem, size = 0x4, offset = 0x4, fixed_abs, tag = 'smem constant byte address 0x4 - core index']
  #allocation1 [shape = 'u32[72,128]{1,0:T(1,128)}', space=vmem, size = 0x9000, scoped, tag = 'internal scratch']
  %s0 = inlined_call_operand.vmem [shape: f32[16,128], index: 0, kind: input, shape index: {}]
  %s1 = inlined_call_operand.vmem [shape: f32[128,128], index: 1, kind: input, shape index: {}]
  %s2 = inlined_call_operand.vmem [shape: f32[16,1], index: 2, kind: input, shape index: {}]
  %s3 = inlined_call_operand.vmem [shape: f32[1,128], index: 3, kind: input, shape index: {}]
  %s4 = inlined_call_operand.vmem [shape: f32[16,128], index: 4, kind: output, shape index: {}]
  %s5 = sld [smem:[#allocation0]]
  $region26: #{_similarity_impl.1} parent=0
    _
  %s7 = ssub.s32 1, %s5
  %s8 = scalar_select 0, %s7, %s5
  // Predicated region
  $region2: #{_similarity_impl.1} parent=0 // pred_check
    _
  $region3: #{_similarity_impl.1} parent=0 // pred_check_branch
    %10 = sbr.rel (0) target = $region5
  $region4: #{_similarity_impl.1} parent=0 // pred_region
    _
  $region5: #{_similarity_impl.1} parent=0 // pred_fallthru
    _
  // Predicated region
  $region6: #{_similarity_impl.1} parent=0 // pred_check
    _
  $region7: #{_similarity_impl.1} parent=0 // pred_check_branch
    %12 = sbr.rel (0) target = $region9
  $region8: #{_similarity_impl.1} parent=0 // pred_region
    _
  $region9: #{_similarity_impl.1} parent=0 // pred_fallthru
    _
  // Predicated region
  $region10: #{_similarity_impl.1} parent=0 // pred_check
    _
  $region11: #{_similarity_impl.1} parent=0 // pred_check_branch
    %14 = sbr.rel (0) target = $region13
  $region12: #{_similarity_impl.1} parent=0 // pred_region
    _
  $region13: #{_similarity_impl.1} parent=0 // pred_fallthru
    _
  // Predicated region
  $region14: #{_similarity_impl.1} parent=0 // pred_check
    _
  $region15: #{_similarity_impl.1} parent=0 // pred_check_branch
    %16 = sbr.rel (0) target = $region17
  $region16: #{_similarity_impl.1} parent=0 // pred_region
    _
  $region17: #{_similarity_impl.1} parent=0 // pred_fallthru
    _
  %v17 = vld [vmem:[%s0] sm:$0xff]
  %v18 = vld [vmem:[%s0 + $0x8] sm:$0xff]
  %v19 = vld [vmem:[%s1] sm:$0xff]
  %v20 = vld [vmem:[%s1 + $0x8] sm:$0xff]
  %v21 = vld [vmem:[%s1 + $0x10] sm:$0xff]
  %v22 = vld [vmem:[%s1 + $0x18] sm:$0xff]
  %v23 = vld [vmem:[%s1 + $0x20] sm:$0xff]
  %v24 = vld [vmem:[%s1 + $0x28] sm:$0xff]
  %v25 = vld [vmem:[%s1 + $0x30] sm:$0xff]
  %v26 = vld [vmem:[%s1 + $0x38] sm:$0xff]
  %v27 = vld [vmem:[%s1 + $0x40] sm:$0xff]
  %v28 = vld [vmem:[%s1 + $0x48] sm:$0xff]
  %v29 = vld [vmem:[%s1 + $0x50] sm:$0xff]
  %v30 = vld [vmem:[%s1 + $0x58] sm:$0xff]
  %v31 = vld [vmem:[%s1 + $0x60] sm:$0xff]
  %v32 = vld [vmem:[%s1 + $0x68] sm:$0xff]
  %v33 = vld [vmem:[%s1 + $0x70] sm:$0xff]
  %v34 = vld [vmem:[%s1 + $0x78] sm:$0xff]
  %35 = vmatpush.xpose.msra.mxu0 %v34
  %36 = vmatpush.xpose.msra.mxu0 %v33
  %37 = vmatpush.xpose.msra.mxu0 %v32
  %38 = vmatpush.xpose.msra.mxu0 %v31
  %39 = vmatpush.xpose.msra.mxu0 %v30
  %40 = vmatpush.xpose.msra.mxu0 %v29
  %41 = vmatpush.xpose.msra.mxu0 %v28
  %42 = vmatpush.xpose.msra.mxu0 %v27
  %43 = vmatpush.xpose.msra.mxu0 %v26
  %44 = vmatpush.xpose.msra.mxu0 %v25
  %45 = vmatpush.xpose.msra.mxu0 %v24
  %46 = vmatpush.xpose.msra.mxu0 %v23
  %47 = vmatpush.xpose.msra.mxu0 %v22
  %48 = vmatpush.xpose.msra.mxu0 %v21
  %49 = vmatpush.xpose.msra.mxu0 %v20
  %50 = vmatpush.xpose.msra.mxu0 %v19
  %51 = vmatmul.f32.gmra.mxu0 %v17
  %v52 = vpop.f32.mrf.mxu0
  %v53 = vadd.f32 0.0, %v52
  %54 = vmatmul.f32.gmra.mxu0 %v18
  %v55 = vpop.f32.mrf.mxu0
  %v56 = vadd.f32 0.0, %v55
  %57 = vdwg.mxu0
  %v58 = vld [vmem:[%s2] sm:$0xff]
  %v59 = vld [vmem:[%s2 + $0x8] sm:$0xff]
  %61 = vset.pattern.permute.xlu0 0
  %62 = vperm.xlu0 %61, %v58
  %v63 = vpop.permute.xlu0 %62
  %66 = vset.pattern.permute.xlu0 0
  %67 = vperm.xlu0 %66, %v59
  %v68 = vpop.permute.xlu0 %67
  %v70 = vmul.f32 %v53, %v63
  %v71 = vmul.f32 %v56, %v68
  %v72 = vld [vmem:[%s3] sm:$0x1]
  %v74 = vperm.slane %v72, 0
  %v76 = vmul.f32 %v70, %v74
  %v77 = vmul.f32 %v71, %v74
  %78 = vst [vmem:[%s4] sm:$0xff] %v76
  %79 = vst [vmem:[%s4 + $0x8] sm:$0xff] %v77
  // Predicated region
  $region18: #{_similarity_impl.1} parent=0 // pred_check
    _
  $region19: #{_similarity_impl.1} parent=0 // pred_check_branch
    %81 = sbr.rel (0) target = $region21
  $region20: #{_similarity_impl.1} parent=0 // pred_region
    _
  $region21: #{_similarity_impl.1} parent=0 // pred_fallthru
    _
  // Predicated region
  $region22: #{_similarity_impl.1} parent=0 // pred_check
    _
  $region23: #{_similarity_impl.1} parent=0 // pred_check_branch
    %83 = sbr.rel (0) target = $region25
  $region24: #{_similarity_impl.1} parent=0 // pred_region
    _
  $region25: #{_similarity_impl.1} parent=0 // pred_fallthru
    _

</llo_original>
